<compile_context>
chip_gen: v5e
topology: v5e:2x2
jax: 0.10.0
libtpu: 0.0.40
codegen_flags: <defaults>
</compile_context>

<pallas_src>
import functools

import jax
import jax.numpy as jnp
from jax.experimental import pallas as pl
from jax.experimental.pallas import tpu as pltpu


def _leaky_softmax_kernel(x_ref, sm_ref, s_ref, *, coeff):
    # Row-tile of x: (block_rows, F). All math in f32 (mandatory on v5e: no
    # bf16 VPU/EUP path there).  Everything is strictly per-row, so garbage
    # rows in a ragged last block stay confined to rows that are masked on
    # the output write.
    x = x_ref[...].astype(jnp.float32)

    m = jnp.max(x, axis=-1, keepdims=True)                 # (bR, 1)   XLU
    num = jnp.exp(x - m)                                   # (bR, F)   EUP
    den = jnp.sum(num, axis=-1, keepdims=True)             # (bR, 1)   XLU
    total = den + coeff * jnp.exp(-m)                      # (bR, 1)

    # Exact reciprocal of the (bR, 1) column (approx vrcp is too coarse for
    # parity with the PyTorch forward), then one broadcast multiply on the
    # VPU instead of a full-tile divide.
    inv = 1.0 / total                                      # (bR, 1)

    sm_ref[...] = (num * inv).astype(sm_ref.dtype)

    # sum(softmax, -1) == den / total exactly -> no second full-width reduce.
    s_ref[...] = jnp.clip(den * inv, 0.0, 1.0).astype(s_ref.dtype)


def _round_up(v, m):
    return ((v + m - 1) // m) * m


def _pick_block_rows(n_rows, n_feat, itemsize):
    """Row-tile size: ~4 MiB of input per grid step, multiple of 16 rows."""
    target_tile_bytes = 4 * 1024 * 1024
    row_bytes = max(n_feat * itemsize, 1)
    br = max(16, (target_tile_bytes // row_bytes) // 16 * 16)
    if br >= n_rows:
        if n_rows <= 16:
            # Single block covering all rows; block dim == full array dim is
            # layout-exempt from the multiple-of-8 rule.
            br = n_rows
        else:
            # Whole problem fits one tile: split into >= 4 steps (>= 2 per
            # TensorCore on v7x) so DMA/compute overlap and neither core
            # sits idle for a whole step.
            br = max(16, _round_up(pl.cdiv(n_rows, 4), 16))
    return int(br)


def leaky_softmax(x, coeff=1.0, block_rows=None):
    """Pallas TPU leaky softmax. x: (N, F). Returns (softmax (N,F), sum (N,1))."""
    n, f = x.shape
    itemsize = jnp.dtype(x.dtype).itemsize
    if block_rows is None:
        block_rows = _pick_block_rows(n, f, itemsize)

    # Ragged last block (N % block_rows != 0) is handled by Pallas: OOB input
    # rows are garbage, math is per-row, OOB output rows are masked on write.
    grid = (pl.cdiv(n, block_rows),)

    kernel = functools.partial(_leaky_softmax_kernel, coeff=float(coeff))

    # VMEM accounting: per pipeline buffer = input tile + softmax tile +
    # lane-padded (bR, 1) sum tile (padded to bR x 128 words in VMEM), times
    # the 2x double-buffering factor, plus ~50% headroom.  Floor at 16 MiB
    # (v5e scoped default), cap at 48 MiB (v7x has 64 MiB physical VMEM).
    per_buffer = block_rows * (2 * f + 128) * itemsize
    vmem_limit = int(min(max(int(2 * per_buffer * 1.5) + (1 << 20), 16 << 20),
                         48 << 20))

    sm, s = pl.pallas_call(
        kernel,
        out_shape=(
            jax.ShapeDtypeStruct((n, f), x.dtype),
            jax.ShapeDtypeStruct((n, 1), x.dtype),
        ),
        grid=grid,
        in_specs=[pl.BlockSpec((block_rows, f), lambda i: (i, 0))],
        out_specs=(
            pl.BlockSpec((block_rows, f), lambda i: (i, 0)),
            pl.BlockSpec((block_rows, 1), lambda i: (i, 0)),
        ),
        compiler_params=pltpu.CompilerParams(
            dimension_semantics=("parallel",),
            vmem_limit_bytes=vmem_limit,
        ),
    )(x)
    return sm, s


def _reference(x, coeff=1.0):
    # Pure-JAX reference mirroring the PyTorch forward exactly.
    m = jnp.max(x, axis=1, keepdims=True)
    num = jnp.exp(x - m)
    den = jnp.sum(num, axis=-1, keepdims=True)
    softmax = num / (den + coeff * jnp.exp(-m))
    return softmax, jnp.clip(jnp.sum(softmax, axis=-1, keepdims=True), 0.0, 1.0)


if __name__ == "__main__":
    # Main case: lane-friendly feature width, grid of 4 row-tiles.
    x = jax.random.normal(jax.random.PRNGKey(0), (64, 128), dtype=jnp.float32)
    sm, s = leaky_softmax(x, coeff=1.0)
    jax.block_until_ready(sm)
    jax.block_until_ready(s)
    sm_ref, s_ref = _reference(x, coeff=1.0)
    assert jnp.allclose(sm, sm_ref, atol=1e-4, rtol=1e-3)
    assert jnp.allclose(s, s_ref, atol=1e-4, rtol=1e-3)

    # Row count not divisible by the tile (exercises the ragged last block).
    x2 = jax.random.normal(jax.random.PRNGKey(1), (100, 256), dtype=jnp.float32)
    sm2, s2 = leaky_softmax(x2, coeff=0.5)
    jax.block_until_ready(sm2)
    sm2_ref, s2_ref = _reference(x2, coeff=0.5)
    assert sm2.shape == (100, 256) and s2.shape == (100, 1)
    assert jnp.allclose(sm2, sm2_ref, atol=1e-4, rtol=1e-3)
    assert jnp.allclose(s2, s2_ref, atol=1e-4, rtol=1e-3)

    # Docstring case: zeros(3, 9) -> uniform probability 0.1 over 9 classes.
    z = jnp.zeros((3, 9), dtype=jnp.float32)
    sm3, s3 = leaky_softmax(z, coeff=1.0)
    jax.block_until_ready(sm3)
    assert jnp.allclose(sm3, 0.1, atol=1e-5)
    assert jnp.allclose(s3, 0.9, atol=1e-5)

    # Zeros wide case: uniform 1/(F+1).
    z2 = jnp.zeros((8, 128), dtype=jnp.float32)
    sm4, _ = leaky_softmax(z2, coeff=1.0)
    jax.block_until_ready(sm4)
    assert jnp.allclose(sm4, 1.0 / 129.0, atol=1e-5)

    print("KERNEL_OK")
</pallas_src>

<mosaic_0001>
module attributes {stable_mosaic.version = 11 : i64} {
  func.func @_leaky_softmax_kernel(%arg0: i32, %arg1: memref<16x128xf32, #tpu.memory_space<vmem>>, %arg2: memref<16x128xf32, #tpu.memory_space<vmem>>, %arg3: memref<16x1xf32, #tpu.memory_space<vmem>>) attributes {dimension_semantics = [#tpu.dimension_semantics<parallel>], iteration_bounds = array<i64: 4>, scalar_prefetch = 0 : i64, scratch_operands = 0 : i64, tpu.core_type = #tpu.core_type<tc>, window_params = [{transform_indices = @transform_0, window_bounds = array<i64: 16, 128>}, {transform_indices = @transform_1, window_bounds = array<i64: 16, 128>}, {transform_indices = @transform_2, window_bounds = array<i64: 16, 1>}]} {
    %c0 = arith.constant 0 : index
    %c0_0 = arith.constant 0 : index
    %0 = vector.load %arg1[%c0, %c0_0] : memref<16x128xf32, #tpu.memory_space<vmem>>, vector<16x128xf32>
    %cst = arith.constant dense<0xFF800000> : vector<16xf32>
    %1 = vector.multi_reduction <maximumf>, %0, %cst [1] : vector<16x128xf32> to vector<16xf32>
    %2 = vector.shape_cast %1 : vector<16xf32> to vector<16x1xf32>
    %3 = vector.broadcast %2 : vector<16x1xf32> to vector<16x128xf32>
    %4 = arith.subf %0, %3 : vector<16x128xf32>
    %5 = math.exp %4 : vector<16x128xf32>
    %cst_1 = arith.constant dense<0.000000e+00> : vector<16xf32>
    %6 = vector.multi_reduction <add>, %5, %cst_1 [1] : vector<16x128xf32> to vector<16xf32>
    %7 = vector.shape_cast %6 : vector<16xf32> to vector<16x1xf32>
    %cst_2 = arith.constant 0.000000e+00 : f32
    %8 = vector.broadcast %cst_2 : f32 to vector<16x1xf32>
    %9 = arith.subf %8, %2 : vector<16x1xf32>
    %10 = math.exp %9 : vector<16x1xf32>
    %cst_3 = arith.constant 1.000000e+00 : f32
    %11 = vector.broadcast %cst_3 : f32 to vector<16x1xf32>
    %12 = arith.mulf %11, %10 : vector<16x1xf32>
    %13 = arith.addf %7, %12 : vector<16x1xf32>
    %cst_4 = arith.constant 1.000000e+00 : f32
    %14 = vector.broadcast %cst_4 : f32 to vector<16x1xf32>
    %15 = arith.divf %14, %13 : vector<16x1xf32>
    %16 = vector.broadcast %15 : vector<16x1xf32> to vector<16x128xf32>
    %17 = arith.mulf %5, %16 : vector<16x128xf32>
    %c0_5 = arith.constant 0 : index
    %c0_6 = arith.constant 0 : index
    %18 = vector.load %arg2[%c0_5, %c0_6] : memref<16x128xf32, #tpu.memory_space<vmem>>, vector<16x128xf32>
    tpu.vector_store %arg2[%c0_5, %c0_6], %17 {strides = array<i32>} : memref<16x128xf32, #tpu.memory_space<vmem>>, vector<16x128xf32>,
    %19 = arith.mulf %7, %15 : vector<16x1xf32>
    %cst_7 = arith.constant 0.000000e+00 : f32
    %cst_8 = arith.constant 1.000000e+00 : f32
    %20 = vector.broadcast %cst_7 : f32 to vector<16x1xf32>
    %21 = arith.maximumf %20, %19 : vector<16x1xf32>
    %22 = vector.broadcast %cst_8 : f32 to vector<16x1xf32>
    %23 = arith.minimumf %22, %21 : vector<16x1xf32>
    %c0_9 = arith.constant 0 : index
    %c0_10 = arith.constant 0 : index
    %24 = vector.load %arg3[%c0_9, %c0_10] : memref<16x1xf32, #tpu.memory_space<vmem>>, vector<16x1xf32>
    tpu.vector_store %arg3[%c0_9, %c0_10], %23 {strides = array<i32>} : memref<16x1xf32, #tpu.memory_space<vmem>>, vector<16x1xf32>,
    return
  }
  func.func @transform_0(%arg0: i32) -> (i32, i32) {
    %c0_i32 = arith.constant 0 : i32
    %c0_i32_0 = arith.constant 0 : i32
    return %arg0, %c0_i32 : i32, i32
  }
  func.func @transform_1(%arg0: i32) -> (i32, i32) {
    %c0_i32 = arith.constant 0 : i32
    %c0_i32_0 = arith.constant 0 : i32
    return %arg0, %c0_i32 : i32, i32
  }
  func.func @transform_2(%arg0: i32) -> (i32, i32) {
    %c0_i32 = arith.constant 0 : i32
    %c0_i32_0 = arith.constant 0 : i32
    return %arg0, %c0_i32 : i32, i32
  }
}

</mosaic_0001>

<llo_original>
// kernel: tpu_custom_call.1
$region0: #{tpu_custom_call.1}
  #allocation0 [shape = 'u32[]', space=smem, size = 0x4, offset = 0x4, fixed_abs, tag = 'smem constant byte address 0x4 - core index']
  #allocation1 [shape = 'u32[72,128]{1,0:T(1,128)}', space=vmem, size = 0x9000, scoped, tag = 'internal scratch']
  %s0 = inlined_call_operand.hbm [shape: f32[64,128], index: 0, kind: input, shape index: {}]
  %s1 = inlined_call_operand.hbm [shape: f32[64,128], index: 1, kind: output, shape index: {0}]
  %s2 = inlined_call_operand.vmem [shape: f32[64,1], index: 2, kind: output, shape index: {1}]
  %3 = xla_tuple %s1, %s2
  %s4 = sld [smem:[#allocation0]]
  $region49: #{tpu_custom_call.1} parent=0
    _
  %s6 = ssub.s32 1, %s4
  %s7 = scalar_select 0, %s6, %s4
  $region1: #{tpu_custom_call.1} parent=0
    #allocation2 [shape = 'u8[16384]{0}', space=vmem, size = 0x4000, scoped, tag = 'input window, operand 0']
    #allocation3 [shape = 's32[2]{0}', space=sflag, size = 0x8, scoped, tag = 'scoped memory for tpu_custom_call.1']
    #allocation4 [shape = 's32[2]{0}', space=sflag, size = 0x8, scoped, tag = 'scoped memory for tpu_custom_call.1']
    #allocation5 [shape = 'u8[16384]{0}', space=vmem, size = 0x4000, scoped, tag = 'output window, operand 0']
    %8 = vsyncpa [#allocation3], 0
    %s9 = scalar_lea.sflag [#allocation3], 1
    %10 = vsyncpa %s9, 0
    %11 = vsyncpa [#allocation4], 0
    %s12 = scalar_lea.sflag [#allocation4], 1
    %13 = vsyncpa %s12, 0
    loop: start=0, step=1, limit=6
    $region2: #{tpu_custom_call.1} parent=1 // loop_pre_header
      _
    $region3: #{tpu_custom_call.1} parent=1 // loop_header
      %s15 = sphi 0, %s19
      %p16 = scmp.ge.s32.totalorder %s15, 6
      %s25 = sphi 0, %s27
      %s28 = sphi 0, %s25
      %s29 = sphi 0, %s28
      %s45 = sphi 0, %s29
      %s51 = sphi 0, %s53
      %s54 = sphi 0, %s51
      %s55 = sphi 0, %s54
      %s71 = sphi 0, %s55
      %s77 = sphi 0, %s79
      %s80 = sphi 0, %s77
      %s81 = sphi 0, %s80
      %s97 = sphi 0, %s81
    $region4: #{tpu_custom_call.1} parent=1 // loop_header_branch
      %18 = sbr.rel (%p16) target = $region8
    $region5: #{tpu_custom_call.1} parent=1 // loop_body
      %s20 = ssub.s32 %s15, 1
      %s21 = ssub.s32 %s15, 2
      %s22 = sadd.s32 %s15, 1
      %s23 = ssub.s32 %s15, %s22
      %p24 = scmp.eq.s32.totalorder %s23, 0
      %s26 = sadd.s32 %s25, 1
      %s27 = scalar_select %p24, %s25, %s26
      %p30 = pneg %p24
      %p31 = scmp.eq.s32.totalorder %s15, 3
      %p32 = por %p30, %p31
      %p33 = scmp.ne.s32.totalorder %s25, %s28
      %p34 = scmp.eq.s32.totalorder %s15, 0
      %p35 = por %p33, %p34
      %p36 = scmp.ne.s32.totalorder %s25, %s28
      %p37 = scmp.eq.s32.totalorder %s20, 3
      %p38 = por %p36, %p37
      %p39 = scmp.ne.s32.totalorder %s28, %s29
      %p40 = scmp.eq.s32.totalorder %s20, 0
      %p41 = por %p39, %p40
      %p42 = scmp.ne.s32.totalorder %s28, %s29
      %p43 = scmp.eq.s32.totalorder %s21, 3
      %p44 = por %p42, %p43
      %p46 = scmp.ne.s32.totalorder %s29, %s45
      %p47 = scmp.eq.s32.totalorder %s21, 0
      %p48 = por %p46, %p47
      %s49 = ssub.s32 %s15, %s22
      %p50 = scmp.eq.s32.totalorder %s49, 0
      %s52 = sadd.s32 %s51, 1
      %s53 = scalar_select %p50, %s51, %s52
      %p56 = pneg %p50
      %p57 = scmp.eq.s32.totalorder %s15, 3
      %p58 = por %p56, %p57
      %p59 = scmp.ne.s32.totalorder %s51, %s54
      %p60 = scmp.eq.s32.totalorder %s15, 0
      %p61 = por %p59, %p60
      %p62 = scmp.ne.s32.totalorder %s51, %s54
      %p63 = scmp.eq.s32.totalorder %s20, 3
      %p64 = por %p62, %p63
      %p65 = scmp.ne.s32.totalorder %s54, %s55
      %p66 = scmp.eq.s32.totalorder %s20, 0
      %p67 = por %p65, %p66
      %p68 = scmp.ne.s32.totalorder %s54, %s55
      %p69 = scmp.eq.s32.totalorder %s21, 3
      %p70 = por %p68, %p69
      %p72 = scmp.ne.s32.totalorder %s55, %s71
      %p73 = scmp.eq.s32.totalorder %s21, 0
      %p74 = por %p72, %p73
      %s75 = ssub.s32 %s15, %s22
      %p76 = scmp.eq.s32.totalorder %s75, 0
      %s78 = sadd.s32 %s77, 1
      %s79 = scalar_select %p76, %s77, %s78
      %p82 = pneg %p76
      %p83 = scmp.eq.s32.totalorder %s15, 3
      %p84 = por %p82, %p83
      %p85 = scmp.ne.s32.totalorder %s77, %s80
      %p86 = scmp.eq.s32.totalorder %s15, 0
      %p87 = por %p85, %p86
      %p88 = scmp.ne.s32.totalorder %s77, %s80
      %p89 = scmp.eq.s32.totalorder %s20, 3
      %p90 = por %p88, %p89
      %p91 = scmp.ne.s32.totalorder %s80, %s81
      %p92 = scmp.eq.s32.totalorder %s20, 0
      %p93 = por %p91, %p92
      %p94 = scmp.ne.s32.totalorder %s80, %s81
      %p95 = scmp.eq.s32.totalorder %s21, 3
      %p96 = por %p94, %p95
      %p98 = scmp.ne.s32.totalorder %s81, %s97
      %p99 = scmp.eq.s32.totalorder %s21, 0
      %p100 = por %p98, %p99
      %p101 = scmp.le.s32.totalorder 1, %s15
      %p102 = scmp.lt.s32.totalorder %s15, 5
      %p103 = pnand %p101, %p102
      %p104 = pneg %p103
      // Predicated region
      $region9: #{tpu_custom_call.1} parent=5 // pred_check
        _
      $region10: #{tpu_custom_call.1} parent=5 // pred_check_branch
        %106 = sbr.rel (%p103) target = $region12
      $region11: #{tpu_custom_call.1} parent=5 // pred_region
        %s107 = ssub.s32 %s15, 1
      $region12: #{tpu_custom_call.1} parent=5 // pred_fallthru
        _
      %p108 = scmp.lt.s32.totalorder %s15, 4
      // Predicated region
      $region13: #{tpu_custom_call.1} parent=5 // pred_check
        %p109 = pneg %p108
      $region14: #{tpu_custom_call.1} parent=5 // pred_check_branch
        %111 = sbr.rel (%p109) target = $region16
      $region15: #{tpu_custom_call.1} parent=5 // pred_region
        // Predicated region
        $region17: #{tpu_custom_call.1} parent=15 // pred_check
          %p112 = pneg %p35
        $region18: #{tpu_custom_call.1} parent=15 // pred_check_branch
          %114 = sbr.rel (%p112) target = $region20
        $region19: #{tpu_custom_call.1} parent=15 // pred_region
          %s115 = sand.u32 %s25, 1
          %s116 = scalar_lea.sflag [#allocation3], %s115
          %s117 = sand.u32 %s25, 1
          %s118 = smul.addr %s117, 16
          %s119 = scalar_lea.vmem [#allocation2], %s118
          %s120 = smul.u32 2, %s15
          %122 = vsyncadd %s116, 0
          %s123 = smul.addr %s120, 8
          %s124 = scalar_lea.hbm %s0, %s123
          %s125 = sshll.u32 %s124, 4
          %s126 = int_to_ptr.hbm [resolvable:$true] %s125
          %s127 = sshll.u32 %s119, 4
          %s128 = int_to_ptr.vmem [resolvable:$true] %s127
          %133 = dma.hbm_to_vmem [thread:$0]  %s126, 256, %s128, %s116, 128, 128, 8
        $region20: #{tpu_custom_call.1} parent=15 // pred_fallthru
          _
      $region16: #{tpu_custom_call.1} parent=5 // pred_fallthru
        _
      %p134 = scmp.le.s32.totalorder 1, %s15
      %p135 = scmp.lt.s32.totalorder %s15, 5
      %p136 = pnand %p134, %p135
      %p137 = pneg %p136
      // Predicated region
      $region21: #{tpu_custom_call.1} parent=5 // pred_check
        _
      $region22: #{tpu_custom_call.1} parent=5 // pred_check_branch
        %139 = sbr.rel (%p136) target = $region24
      $region23: #{tpu_custom_call.1} parent=5 // pred_region
        %s140 = ssub.s32 %s15, 1
        %s141 = sand.u32 %s28, 1
        %s142 = scalar_lea.sflag [#allocation3], %s141
        %s143 = sand.u32 %s28, 1
        %s144 = smul.addr %s143, 16
        %s145 = scalar_lea.vmem [#allocation2], %s144
        // Predicated region
        $region25: #{tpu_custom_call.1} parent=23 // pred_check
          %p146 = pneg %p41
        $region26: #{tpu_custom_call.1} parent=23 // pred_check_branch
          %148 = sbr.rel (%p146) target = $region28
        $region27: #{tpu_custom_call.1} parent=23 // pred_region
          %150 = dma.done %s142, 256
        $region28: #{tpu_custom_call.1} parent=23 // pred_fallthru
          _
        %s151 = sand.u32 %s28, 1
        %s152 = scalar_lea.sflag [#allocation3], %s151
        %s153 = sand.u32 %s28, 1
        %s154 = smul.addr %s153, 16
        %s155 = scalar_lea.vmem [#allocation2], %s154
        %p156 = pneg %p41
        %p157 = pneg %p38
        %p158 = pneg %p67
        %p159 = pneg %p64
        %s160 = sand.u32 %s54, 1
        %s161 = scalar_lea.sflag [#allocation4], %s160
        %s162 = sand.u32 %s54, 1
        %s163 = smul.addr %s162, 16
        %s164 = scalar_lea.vmem [#allocation5], %s163
        %p165 = pneg %p93
        %p166 = pneg %p90
        %s167 = smul.u32 2, %s20
        %p168 = scmp.lt.s32.totalorder %s167, 7
        %s169 = scalar_select %p168, %s167, 7
        %s170 = smul.addr %s169, 8
        %s171 = scalar_lea.vmem %s2, %s170
        %s172 = smul.u32 2, %s20
        %s173 = smul.u32 2, %s20
        %s174 = smul.u32 2, %s20
        %p175 = scmp.lt.s32.totalorder %s174, 7
        %s176 = scalar_select %p175, %s174, 7
        %s177 = smul.addr %s176, 8
        %s178 = scalar_lea.vmem %s2, %s177
        %s179 = smul.u32 2, %s20
        %v180 = vld [vmem:[%s145] sm:$0xff]
        %v181 = vld [vmem:[%s145 + $0x8] sm:$0xff]
        %182 = vmax.xlane.f32.xlu0 %v180
        %v183 = vpop.xlane.xlu0 %182
        %184 = vmax.xlane.f32.xlu0 %v181
        %v185 = vpop.xlane.xlu0 %184
        %v186 = vsub.f32 %v180, %v183
        %v187 = vsub.f32 %v181, %v185
        %v188 = vmul.f32 %v186, 1.442695
        %v189 = vpow.pop %v188
        %v190 = vmul.f32 %v187, 1.442695
        %v191 = vpow.pop %v190
        %192 = vadd.xlane.f32.xlu0 %v189
        %v193 = vpop.xlane.xlu0 %192
        %194 = vadd.xlane.f32.xlu0 %v191
        %v195 = vpop.xlane.xlu0 %194
        %v196 = vsub.f32 0.0, %v183
        %v197 = vsub.f32 0.0, %v185
        %v198 = vmul.f32 %v196, 1.442695
        %v199 = vpow.pop %v198
        %v200 = vmul.f32 %v197, 1.442695
        %v201 = vpow.pop %v200
        %v202 = vadd.f32 %v193, %v199
        %v203 = vadd.f32 %v195, %v201
        %v204 = vrcp.pop %v202
        %v205 = vmul.f32 %v202, %v204
        %v206 = vsub.f32 1.0, %v205
        %v207 = vmul.f32 %v204, %v206
        %v208 = vadd.f32 %v204, %v207
        %vm209 = vweird.f32 %v202
        %vm210 = vweird.f32 %v204
        %vm211 = vmor %vm209, %vm210
        %v212 = vsel %vm211, %v204, %v208
        %v213 = vand.u32 2147483647, %v202
        %vm214 = vcmp.eq.f32.partialorder %v213, 8.507059e+37
        %v215 = vand.u32 %v202, 2147483648
        %v216 = vor.u32 1.1754944e-38, %v215
        %v217 = vsel %vm214, %v216, %v212
        %v218 = vmul.f32 1.0, %v217
        %v219 = vrcp.pop %v203
        %v220 = vmul.f32 %v203, %v219
        %v221 = vsub.f32 1.0, %v220
        %v222 = vmul.f32 %v219, %v221
        %v223 = vadd.f32 %v219, %v222
        %vm224 = vweird.f32 %v203
        %vm225 = vweird.f32 %v219
        %vm226 = vmor %vm224, %vm225
        %v227 = vsel %vm226, %v219, %v223
        %v228 = vand.u32 2147483647, %v203
        %vm229 = vcmp.eq.f32.partialorder %v228, 8.507059e+37
        %v230 = vand.u32 %v203, 2147483648
        %v231 = vor.u32 1.1754944e-38, %v230
        %v232 = vsel %vm229, %v231, %v227
        %v233 = vmul.f32 1.0, %v232
        %v234 = vmul.f32 %v189, %v218
        %v235 = vmul.f32 %v191, %v233
        %236 = vst [vmem:[%s164] sm:$0xff] %v234
        %237 = vst [vmem:[%s164 + $0x8] sm:$0xff] %v235
        %v238 = vmul.f32 %v193, %v218
        %v239 = vmul.f32 %v195, %v233
        %v240 = vmax.f32 %v238, 0.0
        %v241 = vmax.f32 %v239, 0.0
        %v242 = vmin.f32 %v240, 1.0
        %v243 = vmin.f32 %v241, 1.0
        %vm244 = vcmask 7168
        %245 = vst.msk [vmem:[%s178] sm:$0xff] %vm244, %v242
        %246 = vst.msk [vmem:[%s178 + $0x8] sm:$0xff] %vm244, %v243
        %s247 = sand.u32 %s54, 1
        %s248 = scalar_lea.sflag [#allocation4], %s247
        %s249 = sand.u32 %s54, 1
        %s250 = smul.addr %s249, 16
        %s251 = scalar_lea.vmem [#allocation5], %s250
        %s252 = smul.u32 2, %s20
        %p253 = scmp.lt.s32.totalorder %s252, 7
        %s254 = scalar_select %p253, %s252, 7
        %s255 = smul.addr %s254, 8
        %s256 = scalar_lea.vmem %s2, %s255
        // Predicated region
        $region29: #{tpu_custom_call.1} parent=23 // pred_check
          %p257 = pneg %p64
        $region30: #{tpu_custom_call.1} parent=23 // pred_check_branch
          %259 = sbr.rel (%p257) target = $region32
        $region31: #{tpu_custom_call.1} parent=23 // pred_region
          %s260 = smul.u32 2, %s20
          %262 = vsyncadd %s248, 0
          %s263 = smul.addr %s260, 8
          %s264 = scalar_lea.hbm %s1, %s263
          %s265 = sshll.u32 %s251, 4
          %s266 = int_to_ptr.vmem [resolvable:$true] %s265
          %s267 = sshll.u32 %s264, 4
          %s268 = int_to_ptr.hbm [resolvable:$true] %s267
          %273 = dma.vmem_to_hbm [thread:$0]  %s266, 256, %s268, %s248, 128, 128, 8
        $region32: #{tpu_custom_call.1} parent=23 // pred_fallthru
          _
        // Predicated region
        $region33: #{tpu_custom_call.1} parent=23 // pred_check
          %p274 = pneg %p90
        $region34: #{tpu_custom_call.1} parent=23 // pred_check_branch
          %276 = sbr.rel (%p274) target = $region36
        $region35: #{tpu_custom_call.1} parent=23 // pred_region
          %s277 = smul.u32 2, %s20
        $region36: #{tpu_custom_call.1} parent=23 // pred_fallthru
          _
      $region24: #{tpu_custom_call.1} parent=5 // pred_fallthru
        _
      %p278 = scmp.le.s32.totalorder 2, %s15
      // Predicated region
      $region37: #{tpu_custom_call.1} parent=5 // pred_check
        %p279 = pneg %p278
      $region38: #{tpu_custom_call.1} parent=5 // pred_check_branch
        %281 = sbr.rel (%p279) target = $region40
      $region39: #{tpu_custom_call.1} parent=5 // pred_region
        %s282 = ssub.s32 %s15, 2
        // Predicated region
        $region41: #{tpu_custom_call.1} parent=39 // pred_check
          %p283 = pneg %p70
        $region42: #{tpu_custom_call.1} parent=39 // pred_check_branch
          %285 = sbr.rel (%p283) target = $region44
        $region43: #{tpu_custom_call.1} parent=39 // pred_region
          %s286 = sand.u32 %s55, 1
          %s287 = scalar_lea.sflag [#allocation4], %s286
          %s288 = sand.u32 %s55, 1
          %s289 = smul.addr %s288, 16
          %s290 = scalar_lea.vmem [#allocation5], %s289
          %292 = dma.done %s287, 256
        $region44: #{tpu_custom_call.1} parent=39 // pred_fallthru
          _
        // Predicated region
        $region45: #{tpu_custom_call.1} parent=39 // pred_check
          %p293 = pneg %p96
        $region46: #{tpu_custom_call.1} parent=39 // pred_check_branch
          %295 = sbr.rel (%p293) target = $region48
        $region47: #{tpu_custom_call.1} parent=39 // pred_region
          %s296 = smul.u32 2, %s21
          %p297 = scmp.lt.s32.totalorder %s296, 7
          %s298 = scalar_select %p297, %s296, 7
          %s299 = smul.addr %s298, 8
          %s300 = scalar_lea.vmem %s2, %s299
        $region48: #{tpu_custom_call.1} parent=39 // pred_fallthru
          _
      $region40: #{tpu_custom_call.1} parent=5 // pred_fallthru
        _
    $region6: #{tpu_custom_call.1} parent=1 // loop_footer
      %s19 = sadd.s32 1, %s15
    $region7: #{tpu_custom_call.1} parent=1 // loop_footer_branch
      %14 = sbr.rel target = $region3
    $region8: #{tpu_custom_call.1} parent=1 // loop_exit
      _
    %301 = vsyncpa [#allocation3], 1
    %s302 = scalar_lea.sflag [#allocation3], 1
    %303 = vsyncpa %s302, 1
    %304 = vsyncpa [#allocation4], 1
    %s305 = scalar_lea.sflag [#allocation4], 1
    %306 = vsyncpa %s305, 1

</llo_original>
